<compile_context>
chip_gen: v7x
topology: tpu7x:2x2x1
jax: 0.10.0
libtpu: 0.0.40
codegen_flags: <defaults>
</compile_context>

<pallas_src>
import numpy as np

import jax
import jax.numpy as jnp
from jax.experimental import pallas as pl
from jax.experimental.pallas import tpu as pltpu

_LANE = 128
_ACC_ROWS = 64      # (64,128) f32 accumulator: 8 vregs, shallow add chain
_MAX_SPLITS = 2     # leading "parallel" grid axis (v7x has 2 TensorCores)


def _round_up(x, m):
    return -(-x // m) * m


def _vmem_budget_bytes():
    """Returns (byte budget for pipelined buffers, physical VMEM capacity)."""
    try:
        cap = int(pltpu.get_tpu_info().vmem_capacity_bytes)
    except Exception:  # conservative fallback sized for v7x (64 MiB per TC)
        cap = 64 << 20
    return (cap * 3) // 8, cap


def _l1_weighted_sum_kernel(s_ref, t_ref, w_ref, out_ref, acc_ref):
    """Accumulates sum(|s - t| * w_row); one lane-dense (8,128) partial/split."""
    i = pl.program_id(1)                     # sequential reduction axis

    @pl.when(i == 0)
    def _init():
        acc_ref[...] = jnp.zeros_like(acc_ref)

    tm = s_ref.shape[0]
    # Native-dtype tiles were DMA'd in; upcast on the VPU inside the kernel.
    ad = jnp.abs(s_ref[...].astype(jnp.float32) - t_ref[...].astype(jnp.float32))
    # Per-row weights fold both the per-pair 1/n and the 1/num_pairs factor
    # (and are 0 on padding rows), so no tail masking is needed anywhere.
    ad = ad * w_ref[...]                     # (tm,1) broadcast over lanes

    # Lane/sublane-resident accumulation: regroup whole (64,128) slabs and add
    # elementwise -> pure VPU work hidden under the input DMA.
    acc_ref[...] += ad.reshape(tm // _ACC_ROWS, _ACC_ROWS, _LANE).sum(axis=0)

    @pl.when(i == pl.num_programs(1) - 1)
    def _finalize():
        # Lane-dense (8,128) partial per split; tiny final reduce in wrapper.
        out_ref[...] = acc_ref[...].reshape(_ACC_ROWS // 8, 8, _LANE).sum(axis=0)


def l1_distillation(feat_s, feat_t, epoch_ratio=None):
    """Pallas TPU forward of L1Distillation.  `epoch_ratio` is unused (parity)."""
    del epoch_ratio  # unused by L1Distillation.forward
    if not isinstance(feat_s, (list, tuple)):
        # torch's zip iterates the leading dim; equal-shaped slices mean the
        # mean-of-per-slice-means equals the global mean -> treat as one pair.
        feat_s, feat_t = (feat_s,), (feat_t,)

    pairs = [(jnp.asarray(fs), jnp.asarray(ft)) for fs, ft in zip(feat_s, feat_t)]
    num_pairs = len(pairs)
    assert num_pairs > 0

    common = jnp.result_type(*(a.dtype for p in pairs for a in p))
    itemsize = jnp.dtype(common).itemsize

    # Flatten each pair, pad to whole 128-lane rows (|0-0| contributes 0),
    # concatenate into one slab per side, and build per-row weights.
    s_chunks, t_chunks, w_chunks = [], [], []
    for fs, ft in pairs:
        assert fs.shape == ft.shape, "student/teacher feature shapes must match"
        n = fs.size
        rows = _round_up(n, _LANE) // _LANE
        pad = rows * _LANE - n
        s = fs.reshape(-1).astype(common)
        t = ft.reshape(-1).astype(common)
        if pad:
            s = jnp.pad(s, (0, pad))
            t = jnp.pad(t, (0, pad))
        s_chunks.append(s)
        t_chunks.append(t)
        w_chunks.append(np.full((rows,), 1.0 / (num_pairs * n), dtype=np.float32))

    total_rows = sum(w.shape[0] for w in w_chunks)

    # Tile sizing from the chip's VMEM: 2 inputs x 2 pipeline buffers plus the
    # lane-padded (tm,1) weight buffers must fit the budget.  Keeps the fixed
    # ~0.35us/grid-step overhead at a few % of each step's HBM streaming time.
    buf_budget, vmem_cap = _vmem_budget_bytes()
    bytes_per_row = 2 * (2 * _LANE * itemsize + 512)   # 2 bufs x (s + t + w)
    tm_cap = max(_ACC_ROWS, (buf_budget // bytes_per_row) // _ACC_ROWS * _ACC_ROWS)

    num_splits = max(1, min(_MAX_SPLITS, -(-total_rows // tm_cap)))
    blocks_per_split = max(1, -(-total_rows // (num_splits * tm_cap)))
    tm = _round_up(-(-total_rows // (num_splits * blocks_per_split)), _ACC_ROWS)
    tm = min(tm, tm_cap)
    padded_rows = tm * num_splits * blocks_per_split   # waste < 64 rows/block

    s_all = jnp.concatenate(s_chunks)
    t_all = jnp.concatenate(t_chunks)
    w_all = np.concatenate(w_chunks)
    row_pad = padded_rows - total_rows
    if row_pad:
        s_all = jnp.pad(s_all, (0, row_pad * _LANE))
        t_all = jnp.pad(t_all, (0, row_pad * _LANE))
        w_all = np.pad(w_all, (0, row_pad))            # weight 0 on padding

    s2 = s_all.reshape(padded_rows, _LANE)
    t2 = t_all.reshape(padded_rows, _LANE)
    w2 = jnp.asarray(w_all.reshape(padded_rows, 1))

    data_spec = pl.BlockSpec((tm, _LANE), lambda c, i: (c * blocks_per_split + i, 0))
    w_spec = pl.BlockSpec((tm, 1), lambda c, i: (c * blocks_per_split + i, 0))
    out_spec = pl.BlockSpec((8, _LANE), lambda c, i: (c, 0))

    n_elems = padded_rows * _LANE
    cost = pl.CostEstimate(
        flops=4 * n_elems,
        transcendentals=0,
        bytes_accessed=2 * n_elems * itemsize + padded_rows * 4
        + num_splits * 8 * _LANE * 4,
    )

    needed = (4 * tm * _LANE * itemsize     # student + teacher, double-buffered
              + 2 * tm * 512                # (tm,1) f32 weights, lane-padded
              + (1 << 20))                  # accumulator / outputs / slack
    vmem_limit = int(min(vmem_cap - (8 << 20), max(needed + (8 << 20), 32 << 20)))

    partials = pl.pallas_call(
        _l1_weighted_sum_kernel,
        out_shape=jax.ShapeDtypeStruct((8 * num_splits, _LANE), jnp.float32),
        grid_spec=pltpu.PrefetchScalarGridSpec(
            num_scalar_prefetch=0,
            grid=(num_splits, blocks_per_split),
            in_specs=[data_spec, data_spec, w_spec],
            out_specs=out_spec,
            scratch_shapes=[pltpu.VMEM((_ACC_ROWS, _LANE), jnp.float32)],
        ),
        compiler_params=pltpu.CompilerParams(
            dimension_semantics=("parallel", "arbitrary"),
            vmem_limit_bytes=vmem_limit,
        ),
        cost_estimate=cost,
    )(s2, t2, w2)

    # Tiny final reduce over the per-split lane-dense partials.
    return jnp.sum(partials)


if __name__ == "__main__":
    key = jax.random.PRNGKey(0)
    k1, k2, k3, k4 = jax.random.split(key, 4)

    # Small list-of-feature-maps inputs (typical feature-distillation usage),
    # deliberately with two different shapes to exercise the fused path.
    feat_s = [
        jax.random.normal(k1, (2, 4, 16, 16), dtype=jnp.float32),
        jax.random.normal(k2, (2, 8, 8, 8), dtype=jnp.float32),
    ]
    feat_t = [
        jax.random.normal(k3, (2, 4, 16, 16), dtype=jnp.float32),
        jax.random.normal(k4, (2, 8, 8, 8), dtype=jnp.float32),
    ]
    epoch_ratio = 0.5  # unused by L1Distillation.forward (API parity only)

    loss = l1_distillation(feat_s, feat_t, epoch_ratio)
    jax.block_until_ready(loss)

    # Pure-JAX reference of the PyTorch semantics.
    ref = jnp.mean(
        jnp.stack([jnp.mean(jnp.abs(fs - ft)) for fs, ft in zip(feat_s, feat_t)])
    )
    assert jnp.allclose(loss, ref, rtol=1e-5, atol=1e-6), (loss, ref)

    # Also exercise the single-array path (zip over the leading/batch dim).
    loss2 = l1_distillation(feat_s[0], feat_t[0], epoch_ratio)
    jax.block_until_ready(loss2)
    ref2 = jnp.mean(jnp.abs(feat_s[0] - feat_t[0]))
    assert jnp.allclose(loss2, ref2, rtol=1e-5, atol=1e-6), (loss2, ref2)

    print("KERNEL_OK")
</pallas_src>

<mosaic_0001>
module attributes {stable_mosaic.version = 11 : i64} {
  func.func @_l1_weighted_sum_kernel(%arg0: i32, %arg1: i32, %arg2: memref<64x128xf32, #tpu.memory_space<vmem>>, %arg3: memref<64x128xf32, #tpu.memory_space<vmem>>, %arg4: memref<64x1xf32, #tpu.memory_space<vmem>>, %arg5: memref<8x128xf32, #tpu.memory_space<vmem>>, %arg6: memref<64x128xf32, #tpu.memory_space<vmem>>) attributes {dimension_semantics = [#tpu.dimension_semantics<parallel>, #tpu.dimension_semantics<arbitrary>], iteration_bounds = array<i64: 1, 1>, scalar_prefetch = 0 : i64, scratch_operands = 1 : i64, tpu.core_type = #tpu.core_type<tc>, window_params = [{transform_indices = @transform_0, window_bounds = array<i64: 64, 128>}, {transform_indices = @transform_1, window_bounds = array<i64: 64, 128>}, {transform_indices = @transform_2, window_bounds = array<i64: 64, 1>}, {transform_indices = @transform_3, window_bounds = array<i64: 8, 128>}]} {
    %c0_i32 = arith.constant 0 : i32
    %0 = arith.cmpi eq, %arg1, %c0_i32 : i32
    %1 = arith.extui %0 : i1 to i32
    %c0_i32_0 = arith.constant 0 : i32
    %2 = arith.cmpi ne, %1, %c0_i32_0 : i32
    scf.if %2 {
      %cst_12 = arith.constant 0.000000e+00 : f32
      %18 = vector.broadcast %cst_12 : f32 to vector<64x128xf32>
      %c0_13 = arith.constant 0 : index
      %c0_14 = arith.constant 0 : index
      %19 = vector.load %arg6[%c0_13, %c0_14] : memref<64x128xf32, #tpu.memory_space<vmem>>, vector<64x128xf32>
      tpu.vector_store %arg6[%c0_13, %c0_14], %18 {strides = array<i32>} : memref<64x128xf32, #tpu.memory_space<vmem>>, vector<64x128xf32>,
    } else {
    }
    %c0 = arith.constant 0 : index
    %c0_1 = arith.constant 0 : index
    %3 = vector.load %arg2[%c0, %c0_1] : memref<64x128xf32, #tpu.memory_space<vmem>>, vector<64x128xf32>
    %c0_2 = arith.constant 0 : index
    %c0_3 = arith.constant 0 : index
    %4 = vector.load %arg3[%c0_2, %c0_3] : memref<64x128xf32, #tpu.memory_space<vmem>>, vector<64x128xf32>
    %5 = arith.subf %3, %4 : vector<64x128xf32>
    %6 = math.absf %5 : vector<64x128xf32>
    %c0_4 = arith.constant 0 : index
    %c0_5 = arith.constant 0 : index
    %7 = vector.load %arg4[%c0_4, %c0_5] : memref<64x1xf32, #tpu.memory_space<vmem>>, vector<64x1xf32>
    %8 = vector.broadcast %7 : vector<64x1xf32> to vector<64x128xf32>
    %9 = arith.mulf %6, %8 : vector<64x128xf32>
    %c0_6 = arith.constant 0 : index
    %c0_7 = arith.constant 0 : index
    %10 = vector.load %arg6[%c0_6, %c0_7] : memref<64x128xf32, #tpu.memory_space<vmem>>, vector<64x128xf32>
    %11 = vector.shape_cast %9 : vector<64x128xf32> to vector<1x64x128xf32>
    %cst = arith.constant dense<0.000000e+00> : vector<64x128xf32>
    %12 = vector.multi_reduction <add>, %11, %cst [0] : vector<1x64x128xf32> to vector<64x128xf32>
    %13 = arith.addf %10, %12 : vector<64x128xf32>
    %c0_8 = arith.constant 0 : index
    %c0_9 = arith.constant 0 : index
    %14 = vector.load %arg6[%c0_8, %c0_9] : memref<64x128xf32, #tpu.memory_space<vmem>>, vector<64x128xf32>
    tpu.vector_store %arg6[%c0_8, %c0_9], %13 {strides = array<i32>} : memref<64x128xf32, #tpu.memory_space<vmem>>, vector<64x128xf32>,
    %c0_i32_10 = arith.constant 0 : i32
    %15 = arith.cmpi eq, %arg1, %c0_i32_10 : i32
    %16 = arith.extui %15 : i1 to i32
    %c0_i32_11 = arith.constant 0 : i32
    %17 = arith.cmpi ne, %16, %c0_i32_11 : i32
    scf.if %17 {
      %c0_12 = arith.constant 0 : index
      %c0_13 = arith.constant 0 : index
      %18 = vector.load %arg6[%c0_12, %c0_13] : memref<64x128xf32, #tpu.memory_space<vmem>>, vector<64x128xf32>
      %19 = vector.shape_cast %18 : vector<64x128xf32> to vector<8x8x128xf32>
      %cst_14 = arith.constant dense<0.000000e+00> : vector<8x128xf32>
      %20 = vector.multi_reduction <add>, %19, %cst_14 [0] : vector<8x8x128xf32> to vector<8x128xf32>
      %c0_15 = arith.constant 0 : index
      %c0_16 = arith.constant 0 : index
      %21 = vector.load %arg5[%c0_15, %c0_16] : memref<8x128xf32, #tpu.memory_space<vmem>>, vector<8x128xf32>
      tpu.vector_store %arg5[%c0_15, %c0_16], %20 {strides = array<i32>} : memref<8x128xf32, #tpu.memory_space<vmem>>, vector<8x128xf32>,
    } else {
    }
    return
  }
  func.func @transform_0(%arg0: i32, %arg1: i32) -> (i32, i32) {
    %c1_i32 = arith.constant 1 : i32
    %0 = arith.muli %arg0, %c1_i32 : i32
    %1 = arith.addi %0, %arg1 : i32
    %c0_i32 = arith.constant 0 : i32
    %c0_i32_0 = arith.constant 0 : i32
    return %1, %c0_i32 : i32, i32
  }
  func.func @transform_1(%arg0: i32, %arg1: i32) -> (i32, i32) {
    %c1_i32 = arith.constant 1 : i32
    %0 = arith.muli %arg0, %c1_i32 : i32
    %1 = arith.addi %0, %arg1 : i32
    %c0_i32 = arith.constant 0 : i32
    %c0_i32_0 = arith.constant 0 : i32
    return %1, %c0_i32 : i32, i32
  }
  func.func @transform_2(%arg0: i32, %arg1: i32) -> (i32, i32) {
    %c1_i32 = arith.constant 1 : i32
    %0 = arith.muli %arg0, %c1_i32 : i32
    %1 = arith.addi %0, %arg1 : i32
    %c0_i32 = arith.constant 0 : i32
    %c0_i32_0 = arith.constant 0 : i32
    return %1, %c0_i32 : i32, i32
  }
  func.func @transform_3(%arg0: i32, %arg1: i32) -> (i32, i32) {
    %c0_i32 = arith.constant 0 : i32
    %c0_i32_0 = arith.constant 0 : i32
    return %arg0, %c0_i32 : i32, i32
  }
}

</mosaic_0001>

<llo_original>
// kernel: tpu_custom_call.1
$region0: #{tpu_custom_call.1}
  #allocation0 [shape = 'u32[]', space=smem, size = 0x4, offset = 0x4, fixed_abs, tag = 'smem constant byte address 0x4 - core index']
  #allocation1 [shape = 'u32[144,128]{1,0:T(1,128)}', space=vmem, size = 0x12000, scoped, tag = 'internal scratch']
  #allocation2 [shape = 'f32[64,128]{1,0:T(8,128)}', space=vmem, size = 0x8000, scoped, tag = 'scratch operand']
  %s0 = inlined_call_operand.vmem [shape: f32[64,128], index: 0, kind: input, shape index: {}]
  %s1 = inlined_call_operand.hbm [shape: f32[64,128], index: 1, kind: input, shape index: {}]
  %s2 = inlined_call_operand.vmem [shape: f32[64,1], index: 2, kind: input, shape index: {}]
  %s3 = inlined_call_operand.hbm [shape: f32[8,128], index: 3, kind: output, shape index: {}]
  %s4 = sld [smem:[#allocation0]]
  $region34: #{tpu_custom_call.1} parent=0
    _
  %s6 = ssub.s32 1, %s4
  %s7 = scalar_select 0, %s6, %s4
  $region1: #{tpu_custom_call.1} parent=0
    #allocation3 [shape = 'u8[32768]{0}', space=vmem, size = 0x8000, scoped, tag = 'input window, operand 1, single buffered']
    #allocation4 [shape = 's32[1]{0}', space=sflag, size = 0x4, scoped, tag = 'scoped memory for tpu_custom_call.1']
    #allocation5 [shape = 's32[1]{0}', space=sflag, size = 0x4, scoped, tag = 'scoped memory for tpu_custom_call.1']
    #allocation6 [shape = 'u8[4096]{0}', space=vmem, size = 0x1000, scoped, tag = 'output window, operand 0, single buffered']
    %8 = vsyncpa [#allocation4], 0
    %9 = vsyncpa [#allocation5], 0
    // Predicated region
    $region2: #{tpu_custom_call.1} parent=1 // pred_check
      _
    $region3: #{tpu_custom_call.1} parent=1 // pred_check_branch
      %11 = sbr.rel (0) target = $region5
    $region4: #{tpu_custom_call.1} parent=1 // pred_region
      %s12 = sadd.s32 0, 0
      %s13 = smul.u32 8, %s12
      %p14 = scmp.lt.s32.totalorder %s13, 7
      %s15 = scalar_select %p14, %s13, 7
      %s16 = smul.addr %s15, 8
      %s17 = scalar_lea.vmem %s0, %s16
      %s18 = sadd.s32 0, 0
      %s19 = smul.u32 8, %s18
    $region5: #{tpu_custom_call.1} parent=1 // pred_fallthru
      _
    // Predicated region
    $region6: #{tpu_custom_call.1} parent=1 // pred_check
      _
    $region7: #{tpu_custom_call.1} parent=1 // pred_check_branch
      %21 = sbr.rel (0) target = $region9
    $region8: #{tpu_custom_call.1} parent=1 // pred_region
      %s22 = sadd.s32 0, 0
      %s23 = smul.u32 8, %s22
      %s25 = ssub.s32 1024, 1024
      %26 = vsyncadd [#allocation4], %s25
      %s27 = smul.addr %s23, 128
      %s28 = scalar_lea.hbm %s1, %s27
      %s29 = sshll.u32 [#allocation3], 4
      %s30 = int_to_ptr.vmem [resolvable:$true] %s29
      %35 = dma.hbm_to_vmem [thread:$0]  %s28, 1024, %s30, [#allocation4], 128, 128, 8
    $region9: #{tpu_custom_call.1} parent=1 // pred_fallthru
      _
    // Predicated region
    $region10: #{tpu_custom_call.1} parent=1 // pred_check
      _
    $region11: #{tpu_custom_call.1} parent=1 // pred_check_branch
      %37 = sbr.rel (0) target = $region13
    $region12: #{tpu_custom_call.1} parent=1 // pred_region
      %s38 = sadd.s32 0, 0
      %s39 = smul.u32 8, %s38
      %p40 = scmp.lt.s32.totalorder %s39, 7
      %s41 = scalar_select %p40, %s39, 7
      %s42 = smul.addr %s41, 8
      %s43 = scalar_lea.vmem %s2, %s42
      %s44 = sadd.s32 0, 0
      %s45 = smul.u32 8, %s44
    $region13: #{tpu_custom_call.1} parent=1 // pred_fallthru
      _
    // Predicated region
    $region14: #{tpu_custom_call.1} parent=1 // pred_check
      _
    $region15: #{tpu_custom_call.1} parent=1 // pred_check_branch
      %47 = sbr.rel (0) target = $region17
    $region16: #{tpu_custom_call.1} parent=1 // pred_region
      %48 = dma.done [#allocation4], 1024
    $region17: #{tpu_custom_call.1} parent=1 // pred_fallthru
      _
    %s49 = sadd.s32 0, 0
    %s50 = smul.u32 8, %s49
    %p51 = scmp.lt.s32.totalorder %s50, 7
    %s52 = scalar_select %p51, %s50, 7
    %s53 = smul.addr %s52, 8
    %s54 = scalar_lea.vmem %s0, %s53
    %s55 = sadd.s32 0, 0
    %s56 = smul.u32 8, %s55
    %p57 = scmp.lt.s32.totalorder %s56, 7
    %s58 = scalar_select %p57, %s56, 7
    %s59 = smul.addr %s58, 8
    %s60 = scalar_lea.vmem %s2, %s59
    %s61 = sadd.s32 0, 0
    %s62 = smul.u32 8, %s61
    %p63 = scmp.lt.s32.totalorder %s62, 7
    %s64 = scalar_select %p63, %s62, 7
    %s65 = smul.addr %s64, 8
    %s66 = scalar_lea.vmem %s0, %s65
    %s67 = sadd.s32 0, 0
    %s68 = smul.u32 8, %s67
    %s69 = sadd.s32 0, 0
    %s70 = smul.u32 8, %s69
    %s71 = sadd.s32 0, 0
    %s72 = smul.u32 8, %s71
    %p73 = scmp.lt.s32.totalorder %s72, 7
    %s74 = scalar_select %p73, %s72, 7
    %s75 = smul.addr %s74, 8
    %s76 = scalar_lea.vmem %s2, %s75
    %s77 = sadd.s32 0, 0
    %s78 = smul.u32 8, %s77
    %p79 = scmp.eq.s32.totalorder 0, 0
    // Predicated region
    $region18: #{tpu_custom_call.1} parent=1 // pred_check
      %p80 = pneg %p79
    $region19: #{tpu_custom_call.1} parent=1 // pred_check_branch
      %82 = sbr.rel (%p80) target = $region21
    $region20: #{tpu_custom_call.1} parent=1 // pred_region
      %83 = vst [vmem:[#allocation2] sm:$0xff] 0.0
      %84 = vst [vmem:[#allocation2 + $0x8] sm:$0xff] 0.0
      %85 = vst [vmem:[#allocation2 + $0x10] sm:$0xff] 0.0
      %86 = vst [vmem:[#allocation2 + $0x18] sm:$0xff] 0.0
      %87 = vst [vmem:[#allocation2 + $0x20] sm:$0xff] 0.0
      %88 = vst [vmem:[#allocation2 + $0x28] sm:$0xff] 0.0
      %89 = vst [vmem:[#allocation2 + $0x30] sm:$0xff] 0.0
      %90 = vst [vmem:[#allocation2 + $0x38] sm:$0xff] 0.0
    $region21: #{tpu_custom_call.1} parent=1 // pred_fallthru
      _
    %v91 = vld [vmem:[%s66] sm:$0xff]
    %v92 = vld [vmem:[%s66 + $0x8] sm:$0xff]
    %v93 = vld [vmem:[%s66 + $0x10] sm:$0xff]
    %v94 = vld [vmem:[%s66 + $0x18] sm:$0xff]
    %v95 = vld [vmem:[%s66 + $0x20] sm:$0xff]
    %v96 = vld [vmem:[%s66 + $0x28] sm:$0xff]
    %v97 = vld [vmem:[%s66 + $0x30] sm:$0xff]
    %v98 = vld [vmem:[%s66 + $0x38] sm:$0xff]
    %v99 = vld [vmem:[#allocation3] sm:$0xff]
    %v100 = vld [vmem:[#allocation3 + $0x8] sm:$0xff]
    %v101 = vld [vmem:[#allocation3 + $0x10] sm:$0xff]
    %v102 = vld [vmem:[#allocation3 + $0x18] sm:$0xff]
    %v103 = vld [vmem:[#allocation3 + $0x20] sm:$0xff]
    %v104 = vld [vmem:[#allocation3 + $0x28] sm:$0xff]
    %v105 = vld [vmem:[#allocation3 + $0x30] sm:$0xff]
    %v106 = vld [vmem:[#allocation3 + $0x38] sm:$0xff]
    %v107 = vsub.f32 %v91, %v99
    %v108 = vsub.f32 %v92, %v100
    %v109 = vsub.f32 %v93, %v101
    %v110 = vsub.f32 %v94, %v102
    %v111 = vsub.f32 %v95, %v103
    %v112 = vsub.f32 %v96, %v104
    %v113 = vsub.f32 %v97, %v105
    %v114 = vsub.f32 %v98, %v106
    %v115 = vand.u32 2147483647, %v107
    %v116 = vand.u32 2147483647, %v108
    %v117 = vand.u32 2147483647, %v109
    %v118 = vand.u32 2147483647, %v110
    %v119 = vand.u32 2147483647, %v111
    %v120 = vand.u32 2147483647, %v112
    %v121 = vand.u32 2147483647, %v113
    %v122 = vand.u32 2147483647, %v114
    %v123 = vld [vmem:[%s76] sm:$0xff]
    %v124 = vld [vmem:[%s76 + $0x8] sm:$0xff]
    %v125 = vld [vmem:[%s76 + $0x10] sm:$0xff]
    %v126 = vld [vmem:[%s76 + $0x18] sm:$0xff]
    %v127 = vld [vmem:[%s76 + $0x20] sm:$0xff]
    %v128 = vld [vmem:[%s76 + $0x28] sm:$0xff]
    %v129 = vld [vmem:[%s76 + $0x30] sm:$0xff]
    %v130 = vld [vmem:[%s76 + $0x38] sm:$0xff]
    %132 = vset.pattern.permute.xlu0 0
    %133 = vperm.xlu0 %132, %v123
    %v134 = vpop.permute.xlu0 %133
    %137 = vset.pattern.permute.xlu0 0
    %138 = vperm.xlu0 %137, %v124
    %v139 = vpop.permute.xlu0 %138
    %142 = vset.pattern.permute.xlu0 0
    %143 = vperm.xlu0 %142, %v125
    %v144 = vpop.permute.xlu0 %143
    %147 = vset.pattern.permute.xlu0 0
    %148 = vperm.xlu0 %147, %v126
    %v149 = vpop.permute.xlu0 %148
    %152 = vset.pattern.permute.xlu0 0
    %153 = vperm.xlu0 %152, %v127
    %v154 = vpop.permute.xlu0 %153
    %157 = vset.pattern.permute.xlu0 0
    %158 = vperm.xlu0 %157, %v128
    %v159 = vpop.permute.xlu0 %158
    %162 = vset.pattern.permute.xlu0 0
    %163 = vperm.xlu0 %162, %v129
    %v164 = vpop.permute.xlu0 %163
    %167 = vset.pattern.permute.xlu0 0
    %168 = vperm.xlu0 %167, %v130
    %v169 = vpop.permute.xlu0 %168
    %v171 = vmul.f32 %v115, %v134
    %v172 = vmul.f32 %v116, %v139
    %v173 = vmul.f32 %v117, %v144
    %v174 = vmul.f32 %v118, %v149
    %v175 = vmul.f32 %v119, %v154
    %v176 = vmul.f32 %v120, %v159
    %v177 = vmul.f32 %v121, %v164
    %v178 = vmul.f32 %v122, %v169
    %v179 = vld [vmem:[#allocation2] sm:$0xff]
    %v180 = vld [vmem:[#allocation2 + $0x8] sm:$0xff]
    %v181 = vld [vmem:[#allocation2 + $0x10] sm:$0xff]
    %v182 = vld [vmem:[#allocation2 + $0x18] sm:$0xff]
    %v183 = vld [vmem:[#allocation2 + $0x20] sm:$0xff]
    %v184 = vld [vmem:[#allocation2 + $0x28] sm:$0xff]
    %v185 = vld [vmem:[#allocation2 + $0x30] sm:$0xff]
    %v186 = vld [vmem:[#allocation2 + $0x38] sm:$0xff]
    %v187 = vadd.f32 %v171, 0.0
    %v188 = vadd.f32 %v172, 0.0
    %v189 = vadd.f32 %v173, 0.0
    %v190 = vadd.f32 %v174, 0.0
    %v191 = vadd.f32 %v175, 0.0
    %v192 = vadd.f32 %v176, 0.0
    %v193 = vadd.f32 %v177, 0.0
    %v194 = vadd.f32 %v178, 0.0
    %v195 = vadd.f32 %v179, %v187
    %v196 = vadd.f32 %v180, %v188
    %v197 = vadd.f32 %v181, %v189
    %v198 = vadd.f32 %v182, %v190
    %v199 = vadd.f32 %v183, %v191
    %v200 = vadd.f32 %v184, %v192
    %v201 = vadd.f32 %v185, %v193
    %v202 = vadd.f32 %v186, %v194
    %203 = vst [vmem:[#allocation2] sm:$0xff] %v195
    %204 = vst [vmem:[#allocation2 + $0x8] sm:$0xff] %v196
    %205 = vst [vmem:[#allocation2 + $0x10] sm:$0xff] %v197
    %206 = vst [vmem:[#allocation2 + $0x18] sm:$0xff] %v198
    %207 = vst [vmem:[#allocation2 + $0x20] sm:$0xff] %v199
    %208 = vst [vmem:[#allocation2 + $0x28] sm:$0xff] %v200
    %209 = vst [vmem:[#allocation2 + $0x30] sm:$0xff] %v201
    %210 = vst [vmem:[#allocation2 + $0x38] sm:$0xff] %v202
    // Predicated region
    $region22: #{tpu_custom_call.1} parent=1 // pred_check
      %p211 = pneg %p79
    $region23: #{tpu_custom_call.1} parent=1 // pred_check_branch
      %213 = sbr.rel (%p211) target = $region25
    $region24: #{tpu_custom_call.1} parent=1 // pred_region
      %v214 = vld [vmem:[#allocation2] sm:$0xff]
      %v215 = vld [vmem:[#allocation2 + $0x8] sm:$0xff]
      %v216 = vld [vmem:[#allocation2 + $0x10] sm:$0xff]
      %v217 = vld [vmem:[#allocation2 + $0x18] sm:$0xff]
      %v218 = vld [vmem:[#allocation2 + $0x20] sm:$0xff]
      %v219 = vld [vmem:[#allocation2 + $0x28] sm:$0xff]
      %v220 = vld [vmem:[#allocation2 + $0x30] sm:$0xff]
      %v221 = vld [vmem:[#allocation2 + $0x38] sm:$0xff]
      %v222 = vadd.f32 %v214, %v215
      %v223 = vadd.f32 %v222, %v216
      %v224 = vadd.f32 %v223, %v217
      %v225 = vadd.f32 %v224, %v218
      %v226 = vadd.f32 %v225, %v219
      %v227 = vadd.f32 %v226, %v220
      %v228 = vadd.f32 %v227, %v221
      %229 = vst [vmem:[#allocation6] sm:$0xff] %v228
    $region25: #{tpu_custom_call.1} parent=1 // pred_fallthru
      _
    // Predicated region
    $region26: #{tpu_custom_call.1} parent=1 // pred_check
      _
    $region27: #{tpu_custom_call.1} parent=1 // pred_check_branch
      %231 = sbr.rel (0) target = $region29
    $region28: #{tpu_custom_call.1} parent=1 // pred_region
      %s233 = ssub.s32 128, 128
      %234 = vsyncadd [#allocation5], %s233
      %s236 = sshll.u32 [#allocation6], 4
      %s237 = int_to_ptr.vmem [resolvable:$true] %s236
      %239 = dma.vmem_to_hbm [thread:$0]  %s237, 128, %s3, [#allocation5]
    $region29: #{tpu_custom_call.1} parent=1 // pred_fallthru
      _
    // Predicated region
    $region30: #{tpu_custom_call.1} parent=1 // pred_check
      _
    $region31: #{tpu_custom_call.1} parent=1 // pred_check_branch
      %241 = sbr.rel (0) target = $region33
    $region32: #{tpu_custom_call.1} parent=1 // pred_region
      %242 = dma.done [#allocation5], 128
    $region33: #{tpu_custom_call.1} parent=1 // pred_fallthru
      _
    %243 = vsyncpa [#allocation4], 1
    %244 = vsyncpa [#allocation5], 1

</llo_original>
